<compile_context>
chip_gen: v7x
topology: tpu7x:2x2x1
jax: 0.10.0
libtpu: 0.0.40
codegen_flags: <defaults>
</compile_context>

<pallas_src>
import jax
import jax.numpy as jnp
from jax.experimental import pallas as pl
from jax.experimental.pallas import tpu as pltpu

_VMEM_LIMIT_BYTES = 32 * 1024 * 1024     # explicit: raises v5e's 16 MiB default,
                                         # matches v6e/v7x defaults, < v7x physical.
_BLOCK_BYTE_TARGET = 4 * 1024 * 1024     # ~4 MiB/block; 4x (in+out, dbl-buf) = 16 MiB.


def _copy_tile_kernel(x_ref, o_ref):
    # (1, tc, tl) VMEM tiles. Straight copy — DMA + vld/vst only; no reshape,
    # no VPU/XLU work inside the kernel.
    o_ref[...] = x_ref[...]


def _pick_tile(total: int, target: int, quantum: int) -> int:
    """Tile size for one axis: the full extent if it already fits `target`
    (full extent is always a legal block dim), otherwise the largest multiple
    of `quantum` <= target. Ragged extents are handled by a cdiv grid with a
    masked tail block — the tile never falls back to a huge full extent."""
    if total <= target:
        return total
    return max(quantum, (target // quantum) * quantum)


def height_compression_reshape_only(volume_features: jax.Array) -> jax.Array:
    """Preferred zero-cost path: metadata-only merge of the (C, D) axes."""
    N, C, D, H, W = volume_features.shape
    return jnp.reshape(volume_features, (N, C * D, H, W))


def height_compression_pallas(volume_features: jax.Array,
                              *,
                              sublane_tile_target: int = 256,
                              block_byte_target: int = _BLOCK_BYTE_TARGET
                              ) -> jax.Array:
    """(N, C, D, H, W) -> (N, C*D, H, W) via a lane-dense Pallas copy kernel.

    Only use when a materialized copy / fusion anchor is genuinely required;
    otherwise prefer `height_compression_reshape_only` (zero HBM traffic).
    """
    N, C, D, H, W = volume_features.shape
    CD, HW = C * D, H * W
    dtype = volume_features.dtype
    itemsize = jnp.dtype(dtype).itemsize

    # Free, metadata-only flattening so the lane axis (H*W) is lane-dense.
    x = jnp.reshape(volume_features, (N, CD, HW))

    # dtype-aware sublane quantum: 8 for f32, 16 for bf16, 32 for int8/fp8.
    sub_q = max(8, 32 // itemsize)
    tc = _pick_tile(CD, sublane_tile_target, sub_q)
    # Lane tile sized from a per-block byte budget, rounded down to 128.
    lane_target = max(128, (block_byte_target // max(1, tc * itemsize)) // 128 * 128)
    tl = _pick_tile(HW, lane_target, 128)

    gc = pl.cdiv(CD, tc)
    gl = pl.cdiv(HW, tl)

    # Largest parallel axis first -> balanced megacore sharding on v7x even
    # when N is 1-2. All axes independent ("parallel").
    if gl >= gc:
        grid = (gl, gc, N)
        index_map = lambda l, c, n: (n, c, l)
    else:
        grid = (gc, gl, N)
        index_map = lambda c, l, n: (n, c, l)

    total_bytes = N * CD * HW * itemsize

    out = pl.pallas_call(
        _copy_tile_kernel,
        out_shape=jax.ShapeDtypeStruct((N, CD, HW), dtype),
        grid_spec=pltpu.PrefetchScalarGridSpec(
            num_scalar_prefetch=0,
            grid=grid,
            in_specs=[pl.BlockSpec((1, tc, tl), index_map)],
            out_specs=pl.BlockSpec((1, tc, tl), index_map),
        ),
        # Each block writes exactly the region it read -> alias in/out to
        # avoid allocating a second full-size HBM buffer.
        input_output_aliases={0: 0},
        compiler_params=pltpu.CompilerParams(
            dimension_semantics=("parallel", "parallel", "parallel"),
            vmem_limit_bytes=_VMEM_LIMIT_BYTES,
        ),
        # Pure memory movement: zero flops, 2x array bytes of HBM traffic.
        cost_estimate=pl.CostEstimate(
            flops=0, transcendentals=0, bytes_accessed=2 * total_bytes),
    )(x)

    # Free metadata-only reshape back to the NCHW output layout.
    return jnp.reshape(out, (N, CD, H, W))


def height_compression_forward(batch_dict: dict, num_bev_features: int,
                               sparse_input: bool = False,
                               use_pallas: bool = False) -> dict:
    """Mirror of HeightCompression.forward (dense-volume path).

    Default is the zero-copy reshape; set use_pallas=True only when a
    materialized copy is needed as a fusion anchor for downstream BEV work.
    """
    if sparse_input:
        # TODO(synk): spconv .dense() densification is not representable here;
        # a pre-densified 'volume_features' array is required.
        assert 'volume_features' in batch_dict, (
            "sparse_input=True requires a pre-densified 'volume_features' "
            "array (spconv .dense() has no Pallas equivalent here).")
    spatial_volume = batch_dict['volume_features']

    N, C, D, H, W = spatial_volume.shape
    assert C * D == num_bev_features, (
        f"NUM_BEV_FEATURES={num_bev_features} must equal C*D={C * D}")

    if use_pallas:
        spatial_features = height_compression_pallas(spatial_volume)
    else:
        spatial_features = height_compression_reshape_only(spatial_volume)

    batch_dict['spatial_features'] = spatial_features
    batch_dict['spatial_features_stride'] = (
        batch_dict.get('encoded_spconv_tensor_stride', 1) if sparse_input else 1)
    return batch_dict


if __name__ == "__main__":
    # Small, deterministic example: N=2, C=4, D=8, H=16, W=16
    # => NUM_BEV_FEATURES = C * D = 32, flattened lane axis H*W = 256.
    N, C, D, H, W = 2, 4, 8, 16, 16
    key = jax.random.PRNGKey(0)
    volume = jax.random.normal(key, (N, C, D, H, W), dtype=jnp.float32)
    ref = volume.reshape(N, C * D, H, W)

    # 1) Default zero-copy path (recommended production path).
    bd = height_compression_forward({'volume_features': volume},
                                    num_bev_features=C * D)
    out_default = jax.block_until_ready(bd['spatial_features'])
    assert out_default.shape == (N, C * D, H, W)
    assert jnp.array_equal(out_default, ref)
    assert bd['spatial_features_stride'] == 1

    # 2) Pallas copy-kernel path (fusion-anchor variant), f32.
    bd_k = height_compression_forward({'volume_features': volume},
                                      num_bev_features=C * D,
                                      use_pallas=True)
    out_k = jax.block_until_ready(bd_k['spatial_features'])
    assert out_k.shape == (N, C * D, H, W)
    assert out_k.dtype == volume.dtype
    assert jnp.array_equal(out_k, ref)

    # 3) Pallas path, bf16 (exercises dtype-aware sublane quantum).
    volume_bf16 = volume.astype(jnp.bfloat16)
    out_bf16 = jax.block_until_ready(height_compression_pallas(volume_bf16))
    assert jnp.array_equal(out_bf16, volume_bf16.reshape(N, C * D, H, W))

    # 4) Pallas path with a non-128-divisible spatial extent and forced-small
    #    tiles (exercises the cdiv grid + masked tail block fix).
    N2, C2, D2, H2, W2 = 1, 2, 4, 20, 20          # HW = 400 (ragged vs 128)
    key2 = jax.random.PRNGKey(0)
    volume2 = jax.random.normal(key2, (N2, C2, D2, H2, W2), dtype=jnp.float32)
    out_ragged = jax.block_until_ready(
        height_compression_pallas(volume2,
                                  sublane_tile_target=8,
                                  block_byte_target=8 * 128 * 4))
    assert jnp.array_equal(out_ragged, volume2.reshape(N2, C2 * D2, H2, W2))

    print("KERNEL_OK")
</pallas_src>

<mosaic_0001>
module attributes {stable_mosaic.version = 11 : i64} {
  func.func @_copy_tile_kernel(%arg0: i32, %arg1: i32, %arg2: i32, %arg3: memref<1x32x256xf32, #tpu.memory_space<vmem>>, %arg4: memref<1x32x256xf32, #tpu.memory_space<vmem>>) attributes {dimension_semantics = [#tpu.dimension_semantics<parallel>, #tpu.dimension_semantics<parallel>, #tpu.dimension_semantics<parallel>], iteration_bounds = array<i64: 1, 1, 2>, scalar_prefetch = 0 : i64, scratch_operands = 0 : i64, tpu.core_type = #tpu.core_type<tc>, window_params = [{transform_indices = @transform_0, window_bounds = array<i64: 1, 32, 256>}, {transform_indices = @transform_1, window_bounds = array<i64: 1, 32, 256>}]} {
    %c0 = arith.constant 0 : index
    %c0_0 = arith.constant 0 : index
    %c0_1 = arith.constant 0 : index
    %0 = vector.load %arg3[%c0, %c0_0, %c0_1] : memref<1x32x256xf32, #tpu.memory_space<vmem>>, vector<1x32x256xf32>
    %c0_2 = arith.constant 0 : index
    %c0_3 = arith.constant 0 : index
    %c0_4 = arith.constant 0 : index
    %1 = vector.load %arg4[%c0_2, %c0_3, %c0_4] : memref<1x32x256xf32, #tpu.memory_space<vmem>>, vector<1x32x256xf32>
    tpu.vector_store %arg4[%c0_2, %c0_3, %c0_4], %0 {strides = array<i32>} : memref<1x32x256xf32, #tpu.memory_space<vmem>>, vector<1x32x256xf32>,
    return
  }
  func.func @transform_0(%arg0: i32, %arg1: i32, %arg2: i32) -> (i32, i32, i32) {
    %c0_i32 = arith.constant 0 : i32
    return %arg2, %arg1, %arg0 : i32, i32, i32
  }
  func.func @transform_1(%arg0: i32, %arg1: i32, %arg2: i32) -> (i32, i32, i32) {
    %c0_i32 = arith.constant 0 : i32
    return %arg2, %arg1, %arg0 : i32, i32, i32
  }
}

</mosaic_0001>

<llo_original>
// kernel: tpu_custom_call.1
$region0: #{tpu_custom_call.1}
  #allocation0 [shape = 'u32[]', space=smem, size = 0x4, offset = 0x4, fixed_abs, tag = 'smem constant byte address 0x4 - core index']
  #allocation1 [shape = 'u32[144,128]{1,0:T(1,128)}', space=vmem, size = 0x12000, scoped, tag = 'internal scratch']
  %s0 = inlined_call_operand.hbm [shape: f32[2,32,256], index: 0, kind: input, shape index: {}, may-alias: {0,1}]
  %s1 = inlined_call_operand.hbm [shape: f32[2,32,256], index: 1, kind: output, shape index: {}, may-alias: {0,1}]
  %s2 = sld [smem:[#allocation0]]
  $region41: #{tpu_custom_call.1} parent=0
    _
  %s4 = ssub.s32 1, %s2
  %s5 = scalar_select 0, %s4, %s2
  $region1: #{tpu_custom_call.1} parent=0
    #allocation2 [shape = 'u8[65536]{0}', space=vmem, size = 0x10000, scoped, tag = 'input window, operand 0']
    #allocation3 [shape = 's32[2]{0}', space=sflag, size = 0x8, scoped, tag = 'scoped memory for tpu_custom_call.1']
    #allocation4 [shape = 's32[2]{0}', space=sflag, size = 0x8, scoped, tag = 'scoped memory for tpu_custom_call.1']
    #allocation5 [shape = 'u8[65536]{0}', space=vmem, size = 0x10000, scoped, tag = 'output window, operand 0']
    %6 = vsyncpa [#allocation3], 0
    %s7 = scalar_lea.sflag [#allocation3], 1
    %8 = vsyncpa %s7, 0
    %9 = vsyncpa [#allocation4], 0
    %s10 = scalar_lea.sflag [#allocation4], 1
    %11 = vsyncpa %s10, 0
    loop: start=0, step=1, limit=4
    $region2: #{tpu_custom_call.1} parent=1 // loop_pre_header
      _
    $region3: #{tpu_custom_call.1} parent=1 // loop_header
      %s13 = sphi 0, %s17
      %p14 = scmp.ge.s32.totalorder %s13, 4
      %s20 = sphi 0, %s39
      %s21 = sphi 0, %s35
      %s22 = sphi 0, %s31
      %s23 = sphi 0, %s20
      %s24 = sphi 0, %s21
      %s25 = sphi 0, %s22
      %s26 = sphi 0, %s23
      %s27 = sphi 0, %s24
      %s28 = sphi 0, %s25
      %s46 = sphi 0, %s48
      %s49 = sphi 0, %s46
      %s50 = sphi 0, %s49
      %s66 = sphi 0, %s50
      %s76 = sphi 0, %s78
      %s79 = sphi 0, %s76
      %s80 = sphi 0, %s79
      %s96 = sphi 0, %s80
    $region4: #{tpu_custom_call.1} parent=1 // loop_header_branch
      %16 = sbr.rel (%p14) target = $region8
    $region5: #{tpu_custom_call.1} parent=1 // loop_body
      %s18 = ssub.s32 %s13, 1
      %s19 = ssub.s32 %s13, 2
      %s29 = sadd.s32 1, %s22
      %p30 = scmp.ge.s32.totalorder %s29, 2
      %s31 = scalar_select %p30, 0, %s29
      %s32 = sadd.s32 1, %s21
      %s33 = scalar_select %p30, %s32, %s21
      %p34 = scmp.ge.s32.totalorder %s33, 1
      %s35 = scalar_select %p34, 0, %s33
      %s36 = sadd.s32 1, %s20
      %s37 = scalar_select %p34, %s36, %s20
      %p38 = scmp.ge.s32.totalorder %s37, 1
      %s39 = scalar_select %p38, 0, %s37
      %s40 = ssub.s32 %s22, %s31
      %s41 = ssub.s32 %s21, %s35
      %s42 = sor.u32 %s40, %s41
      %s43 = ssub.s32 %s20, %s39
      %s44 = sor.u32 %s42, %s43
      %p45 = scmp.eq.s32.totalorder %s44, 0
      %s47 = sadd.s32 %s46, 1
      %s48 = scalar_select %p45, %s46, %s47
      %p51 = pneg %p45
      %p52 = scmp.eq.s32.totalorder %s13, 1
      %p53 = por %p51, %p52
      %p54 = scmp.ne.s32.totalorder %s46, %s49
      %p55 = scmp.eq.s32.totalorder %s13, 0
      %p56 = por %p54, %p55
      %p57 = scmp.ne.s32.totalorder %s46, %s49
      %p58 = scmp.eq.s32.totalorder %s18, 1
      %p59 = por %p57, %p58
      %p60 = scmp.ne.s32.totalorder %s49, %s50
      %p61 = scmp.eq.s32.totalorder %s18, 0
      %p62 = por %p60, %p61
      %p63 = scmp.ne.s32.totalorder %s49, %s50
      %p64 = scmp.eq.s32.totalorder %s19, 1
      %p65 = por %p63, %p64
      %p67 = scmp.ne.s32.totalorder %s50, %s66
      %p68 = scmp.eq.s32.totalorder %s19, 0
      %p69 = por %p67, %p68
      %s70 = ssub.s32 %s22, %s31
      %s71 = ssub.s32 %s21, %s35
      %s72 = sor.u32 %s70, %s71
      %s73 = ssub.s32 %s20, %s39
      %s74 = sor.u32 %s72, %s73
      %p75 = scmp.eq.s32.totalorder %s74, 0
      %s77 = sadd.s32 %s76, 1
      %s78 = scalar_select %p75, %s76, %s77
      %p81 = pneg %p75
      %p82 = scmp.eq.s32.totalorder %s13, 1
      %p83 = por %p81, %p82
      %p84 = scmp.ne.s32.totalorder %s76, %s79
      %p85 = scmp.eq.s32.totalorder %s13, 0
      %p86 = por %p84, %p85
      %p87 = scmp.ne.s32.totalorder %s76, %s79
      %p88 = scmp.eq.s32.totalorder %s18, 1
      %p89 = por %p87, %p88
      %p90 = scmp.ne.s32.totalorder %s79, %s80
      %p91 = scmp.eq.s32.totalorder %s18, 0
      %p92 = por %p90, %p91
      %p93 = scmp.ne.s32.totalorder %s79, %s80
      %p94 = scmp.eq.s32.totalorder %s19, 1
      %p95 = por %p93, %p94
      %p97 = scmp.ne.s32.totalorder %s80, %s96
      %p98 = scmp.eq.s32.totalorder %s19, 0
      %p99 = por %p97, %p98
      %p100 = scmp.le.s32.totalorder 1, %s13
      %p101 = scmp.lt.s32.totalorder %s13, 3
      %p102 = pnand %p100, %p101
      %p103 = pneg %p102
      // Predicated region
      $region9: #{tpu_custom_call.1} parent=5 // pred_check
        _
      $region10: #{tpu_custom_call.1} parent=5 // pred_check_branch
        %105 = sbr.rel (%p102) target = $region12
      $region11: #{tpu_custom_call.1} parent=5 // pred_region
        %s106 = ssub.s32 %s13, 1
      $region12: #{tpu_custom_call.1} parent=5 // pred_fallthru
        _
      %p107 = scmp.lt.s32.totalorder %s13, 2
      // Predicated region
      $region13: #{tpu_custom_call.1} parent=5 // pred_check
        %p108 = pneg %p107
      $region14: #{tpu_custom_call.1} parent=5 // pred_check_branch
        %110 = sbr.rel (%p108) target = $region16
      $region15: #{tpu_custom_call.1} parent=5 // pred_region
        // Predicated region
        $region17: #{tpu_custom_call.1} parent=15 // pred_check
          %p111 = pneg %p56
        $region18: #{tpu_custom_call.1} parent=15 // pred_check_branch
          %113 = sbr.rel (%p111) target = $region20
        $region19: #{tpu_custom_call.1} parent=15 // pred_region
          %s114 = sand.u32 %s46, 1
          %s115 = scalar_lea.sflag [#allocation3], %s114
          %s116 = sand.u32 %s46, 1
          %s117 = smul.addr %s116, 64
          %s118 = scalar_lea.vmem [#allocation2], %s117
          %s119 = smul.u32 4, %s21
          %s120 = smul.u32 2, %s20
          %s122 = ssub.s32 1024, 1024
          %123 = vsyncadd %s115, %s122
          %s124 = smul.addr %s119, 2
          %s125 = sadd.s32 %s120, %s124
          %s126 = smul.addr %s22, 8
          %s127 = sadd.s32 %s125, %s126
          %s128 = smul.addr %s127, 128
          %s129 = scalar_lea.hbm %s0, %s128
          %s130 = sshll.u32 %s118, 4
          %s131 = int_to_ptr.vmem [resolvable:$true] %s130
          %136 = dma.hbm_to_vmem [thread:$0]  %s129, 1024, %s131, %s115, 256, 256, 16
        $region20: #{tpu_custom_call.1} parent=15 // pred_fallthru
          _
      $region16: #{tpu_custom_call.1} parent=5 // pred_fallthru
        _
      %p137 = scmp.le.s32.totalorder 1, %s13
      %p138 = scmp.lt.s32.totalorder %s13, 3
      %p139 = pnand %p137, %p138
      %p140 = pneg %p139
      // Predicated region
      $region21: #{tpu_custom_call.1} parent=5 // pred_check
        _
      $region22: #{tpu_custom_call.1} parent=5 // pred_check_branch
        %142 = sbr.rel (%p139) target = $region24
      $region23: #{tpu_custom_call.1} parent=5 // pred_region
        %s143 = ssub.s32 %s13, 1
        %s144 = sand.u32 %s49, 1
        %s145 = scalar_lea.sflag [#allocation3], %s144
        %s146 = sand.u32 %s49, 1
        %s147 = smul.addr %s146, 64
        %s148 = scalar_lea.vmem [#allocation2], %s147
        // Predicated region
        $region25: #{tpu_custom_call.1} parent=23 // pred_check
          %p149 = pneg %p62
        $region26: #{tpu_custom_call.1} parent=23 // pred_check_branch
          %151 = sbr.rel (%p149) target = $region28
        $region27: #{tpu_custom_call.1} parent=23 // pred_region
          %152 = dma.done %s145, 1024
        $region28: #{tpu_custom_call.1} parent=23 // pred_fallthru
          _
        %s153 = sand.u32 %s49, 1
        %s154 = scalar_lea.sflag [#allocation3], %s153
        %s155 = sand.u32 %s49, 1
        %s156 = smul.addr %s155, 64
        %s157 = scalar_lea.vmem [#allocation2], %s156
        %p158 = pneg %p62
        %p159 = pneg %p59
        %p160 = pneg %p92
        %p161 = pneg %p89
        %s162 = sand.u32 %s79, 1
        %s163 = scalar_lea.sflag [#allocation4], %s162
        %s164 = sand.u32 %s79, 1
        %s165 = smul.addr %s164, 64
        %s166 = scalar_lea.vmem [#allocation5], %s165
        %s167 = smul.u32 4, %s24
        %s168 = smul.u32 2, %s23
        %s169 = smul.u32 4, %s24
        %s170 = smul.u32 2, %s23
        %v171 = vld [vmem:[%s148] sm:$0xff]
        %v172 = vld [vmem:[%s148 + $0x8] sm:$0xff]
        %v173 = vld [vmem:[%s148 + $0x10] sm:$0xff]
        %v174 = vld [vmem:[%s148 + $0x18] sm:$0xff]
        %v175 = vld [vmem:[%s148 + $0x20] sm:$0xff]
        %v176 = vld [vmem:[%s148 + $0x28] sm:$0xff]
        %v177 = vld [vmem:[%s148 + $0x30] sm:$0xff]
        %v178 = vld [vmem:[%s148 + $0x38] sm:$0xff]
        %179 = vst [vmem:[%s166] sm:$0xff] %v171
        %180 = vst [vmem:[%s166 + $0x8] sm:$0xff] %v172
        %181 = vst [vmem:[%s166 + $0x10] sm:$0xff] %v173
        %182 = vst [vmem:[%s166 + $0x18] sm:$0xff] %v174
        %183 = vst [vmem:[%s166 + $0x20] sm:$0xff] %v175
        %184 = vst [vmem:[%s166 + $0x28] sm:$0xff] %v176
        %185 = vst [vmem:[%s166 + $0x30] sm:$0xff] %v177
        %186 = vst [vmem:[%s166 + $0x38] sm:$0xff] %v178
        %s187 = sand.u32 %s79, 1
        %s188 = scalar_lea.sflag [#allocation4], %s187
        %s189 = sand.u32 %s79, 1
        %s190 = smul.addr %s189, 64
        %s191 = scalar_lea.vmem [#allocation5], %s190
        // Predicated region
        $region29: #{tpu_custom_call.1} parent=23 // pred_check
          %p192 = pneg %p89
        $region30: #{tpu_custom_call.1} parent=23 // pred_check_branch
          %194 = sbr.rel (%p192) target = $region32
        $region31: #{tpu_custom_call.1} parent=23 // pred_region
          %s195 = smul.u32 4, %s24
          %s196 = smul.u32 2, %s23
          %s198 = ssub.s32 1024, 1024
          %199 = vsyncadd %s188, %s198
          %s200 = smul.addr %s195, 2
          %s201 = sadd.s32 %s196, %s200
          %s202 = smul.addr %s25, 8
          %s203 = sadd.s32 %s201, %s202
          %s204 = smul.addr %s203, 128
          %s205 = scalar_lea.hbm %s1, %s204
          %s206 = sshll.u32 %s191, 4
          %s207 = int_to_ptr.vmem [resolvable:$true] %s206
          %212 = dma.vmem_to_hbm [thread:$0]  %s207, 1024, %s205, %s188, 256, 256, 16
        $region32: #{tpu_custom_call.1} parent=23 // pred_fallthru
          _
      $region24: #{tpu_custom_call.1} parent=5 // pred_fallthru
        _
      %p213 = scmp.le.s32.totalorder 2, %s13
      // Predicated region
      $region33: #{tpu_custom_call.1} parent=5 // pred_check
        %p214 = pneg %p213
      $region34: #{tpu_custom_call.1} parent=5 // pred_check_branch
        %216 = sbr.rel (%p214) target = $region36
      $region35: #{tpu_custom_call.1} parent=5 // pred_region
        %s217 = ssub.s32 %s13, 2
        // Predicated region
        $region37: #{tpu_custom_call.1} parent=35 // pred_check
          %p218 = pneg %p95
        $region38: #{tpu_custom_call.1} parent=35 // pred_check_branch
          %220 = sbr.rel (%p218) target = $region40
        $region39: #{tpu_custom_call.1} parent=35 // pred_region
          %s221 = sand.u32 %s80, 1
          %s222 = scalar_lea.sflag [#allocation4], %s221
          %s223 = sand.u32 %s80, 1
          %s224 = smul.addr %s223, 64
          %s225 = scalar_lea.vmem [#allocation5], %s224
          %226 = dma.done %s222, 1024
        $region40: #{tpu_custom_call.1} parent=35 // pred_fallthru
          _
      $region36: #{tpu_custom_call.1} parent=5 // pred_fallthru
        _
    $region6: #{tpu_custom_call.1} parent=1 // loop_footer
      %s17 = sadd.s32 1, %s13
    $region7: #{tpu_custom_call.1} parent=1 // loop_footer_branch
      %12 = sbr.rel target = $region3
    $region8: #{tpu_custom_call.1} parent=1 // loop_exit
      _
    %227 = vsyncpa [#allocation3], 1
    %s228 = scalar_lea.sflag [#allocation3], 1
    %229 = vsyncpa %s228, 1
    %230 = vsyncpa [#allocation4], 1
    %s231 = scalar_lea.sflag [#allocation4], 1
    %232 = vsyncpa %s231, 1

</llo_original>
